<compile_context>
chip_gen: v5e
topology: v5e:2x2
jax: 0.10.0
libtpu: 0.0.40
codegen_flags: <defaults>
</compile_context>

<pallas_src>
import jax
import jax.numpy as jnp
from jax import lax
from jax.experimental import pallas as pl
from jax.experimental.pallas import tpu as pltpu


def _round_up(x, m):
    return ((x + m - 1) // m) * m


def _make_unpool_kernel(use_acc, n_passes):
    """use_acc: keep an f32 scratch (non-f32 outputs). n_passes: 1 or 3."""

    def kernel(perm_ref, x_down_ref, o_ref, *scratch):
        acc_ref = scratch[0] if use_acc else o_ref
        k = pl.program_id(2)

        @pl.when(k == 0)
        def _init():
            acc_ref[...] = jnp.zeros_like(acc_ref)

        tm = o_ref.shape[0]
        tk = x_down_ref.shape[0]

        # one_hot[i, j] = 1 iff x_down row j scatters into output row
        # (row_base + i).  Built via a cheap (1, tk) subtract + iota compare.
        row_base = pl.program_id(0) * tm
        perm_rel = perm_ref[...] - row_base                       # (1, tk)
        one_hot = lax.broadcasted_iota(jnp.int32, (tm, tk), 0) == perm_rel

        x = x_down_ref[...]
        if n_passes == 1:
            # x is already bf16 (or native narrow dtype): single MXU pass.
            contrib = jnp.dot(
                one_hot.astype(x.dtype), x,
                preferred_element_type=jnp.float32)
        else:
            # Exact 3-chunk bf16 split of f32 x_down:
            #   b1 = bf16(x); b2 = bf16(x - b1); b3 = bf16(x - b1 - b2)
            # with b1 + b2 + b3 == x exactly (24 mantissa bits covered).
            # one_hot is exactly representable in bf16, so the three
            # single-pass bf16 matmuls reproduce the f32 copy bit-exactly
            # at half the MXU cost of Precision.HIGHEST.
            oh = one_hot.astype(jnp.bfloat16)
            b1 = x.astype(jnp.bfloat16)
            r1 = x - b1.astype(jnp.float32)
            b2 = r1.astype(jnp.bfloat16)
            b3 = (r1 - b2.astype(jnp.float32)).astype(jnp.bfloat16)
            contrib = (
                jnp.dot(oh, b1, preferred_element_type=jnp.float32)
                + jnp.dot(oh, b2, preferred_element_type=jnp.float32)
                + jnp.dot(oh, b3, preferred_element_type=jnp.float32)
            )

        acc_ref[...] += contrib.astype(acc_ref.dtype)

        if use_acc:
            @pl.when(k == pl.num_programs(2) - 1)
            def _finalize():
                o_ref[...] = acc_ref[...].astype(o_ref.dtype)

    return kernel


def unpool(x_down, x_up, perm, *, tm_cap=512, tc_cap=512, tk_cap=512):
    """Pallas equivalent of Unpool.forward(x_down, x_up, perm)."""
    n_up = x_up.shape[0]
    n_down, c = x_down.shape
    out_dtype = x_up.dtype

    # Compute dtype: bf16 output -> cast once here (matches the reference's
    # single rounding) and use a single bf16 MXU pass; otherwise keep f32
    # (exact 3-pass split in-kernel) or native bf16 inputs.
    if out_dtype == jnp.dtype(jnp.bfloat16):
        xd = x_down.astype(jnp.bfloat16)
    elif x_down.dtype not in (jnp.dtype(jnp.float32), jnp.dtype(jnp.bfloat16)):
        xd = x_down.astype(jnp.float32)
    else:
        xd = x_down
    n_passes = 3 if xd.dtype == jnp.dtype(jnp.float32) else 1
    use_acc = out_dtype != jnp.dtype(jnp.float32)

    # ---- tile sizing: big lane-dense tiles, ragged edges handled by cdiv ----
    tm = min(_round_up(n_up, 8), tm_cap)       # output-row tile
    tc = min(_round_up(c, 128), tc_cap)        # channel tile (lane-dense)
    tk = n_down if n_down <= tk_cap else tk_cap  # contraction (n_down) tile
    k_pad = _round_up(n_down, tk)

    # Guarded K padding: only when n_down is not a multiple of tk.  Zero rows
    # + perm = -1 keep the padded rows inert (avoids garbage in ragged blocks
    # feeding the MXU).  No padding of rows/channels of the OUTPUT at all.
    perm_p = perm.astype(jnp.int32)
    if k_pad != n_down:
        xd = jnp.pad(xd, ((0, k_pad - n_down), (0, 0)))
        perm_p = jnp.pad(perm_p, (0, k_pad - n_down), constant_values=-1)
    perm_p = perm_p.reshape(1, k_pad)

    grid = (pl.cdiv(n_up, tm), pl.cdiv(c, tc), k_pad // tk)

    scratch_shapes = [pltpu.VMEM((tm, tc), jnp.float32)] if use_acc else []

    out = pl.pallas_call(
        _make_unpool_kernel(use_acc, n_passes),
        out_shape=jax.ShapeDtypeStruct((n_up, c), out_dtype),
        grid_spec=pltpu.PrefetchScalarGridSpec(
            num_scalar_prefetch=0,
            grid=grid,
            in_specs=[
                pl.BlockSpec((1, tk), lambda i, j, k: (0, k)),    # perm
                pl.BlockSpec((tk, tc), lambda i, j, k: (k, j)),   # x_down
            ],
            out_specs=pl.BlockSpec((tm, tc), lambda i, j, k: (i, j)),
            scratch_shapes=scratch_shapes,
        ),
        compiler_params=pltpu.CompilerParams(
            dimension_semantics=("parallel", "parallel", "arbitrary"),
            vmem_limit_bytes=48 * 1024 * 1024,
        ),
    )(perm_p, xd)

    return out


if __name__ == "__main__":
    key = jax.random.PRNGKey(0)

    cases = [
        # (n_up, n_down, c, out_dtype)
        (16, 8, 32, jnp.float32),      # tiny, single block everywhere
        (300, 130, 200, jnp.float32),  # ragged rows/channels, single K block
        (700, 600, 100, jnp.float32),  # 2 K tiles (600 > 512) + 2 row tiles
        (64, 40, 48, jnp.bfloat16),    # bf16 output fast path (1 MXU pass)
    ]

    for n_up, n_down, c, out_dtype in cases:
        key, k1, k2, k3 = jax.random.split(key, 4)
        x_down = jax.random.normal(k1, (n_down, c), dtype=jnp.float32)
        # x_up: only its first dim and dtype matter; second dim arbitrary.
        x_up = jax.random.normal(k2, (n_up, 5), dtype=jnp.float32).astype(out_dtype)
        # perm: distinct target rows in [0, n_up) for each row of x_down.
        perm = jax.random.permutation(k3, jnp.arange(n_up, dtype=jnp.int32))[:n_down]

        out = jax.block_until_ready(unpool(x_down, x_up, perm))

        # Pure-JAX reference of the PyTorch semantics.
        ref = (jnp.zeros((n_up, c), dtype=out_dtype)
               .at[perm].set(x_down.astype(out_dtype)))

        assert out.shape == ref.shape, (out.shape, ref.shape)
        assert out.dtype == ref.dtype, (out.dtype, ref.dtype)
        assert jnp.allclose(out.astype(jnp.float32), ref.astype(jnp.float32),
                            atol=1e-6, rtol=1e-6), (
            f"mismatch vs reference at {(n_up, n_down, c, str(out_dtype))}"
        )

    print("KERNEL_OK")
</pallas_src>

<mosaic_0001>
module attributes {stable_mosaic.version = 11 : i64} {
  func.func @kernel(%arg0: i32, %arg1: i32, %arg2: i32, %arg3: memref<1x8xi32, #tpu.memory_space<vmem>>, %arg4: memref<8x128xf32, #tpu.memory_space<vmem>>, %arg5: memref<16x128xf32, #tpu.memory_space<vmem>>) attributes {dimension_semantics = [#tpu.dimension_semantics<parallel>, #tpu.dimension_semantics<parallel>, #tpu.dimension_semantics<arbitrary>], iteration_bounds = array<i64: 1, 1, 1>, scalar_prefetch = 0 : i64, scratch_operands = 0 : i64, tpu.core_type = #tpu.core_type<tc>, window_params = [{transform_indices = @transform_0, window_bounds = array<i64: 1, 8>}, {transform_indices = @transform_1, window_bounds = array<i64: 8, 128>}, {transform_indices = @transform_2, window_bounds = array<i64: 16, 128>}]} {
    %c0_i32 = arith.constant 0 : i32
    %0 = arith.cmpi eq, %arg2, %c0_i32 : i32
    %1 = arith.extui %0 : i1 to i32
    %c0_i32_0 = arith.constant 0 : i32
    %2 = arith.cmpi ne, %1, %c0_i32_0 : i32
    scf.if %2 {
      %cst_10 = arith.constant 0.000000e+00 : f32
      %29 = vector.broadcast %cst_10 : f32 to vector<16x128xf32>
      %c0_11 = arith.constant 0 : index
      %c0_12 = arith.constant 0 : index
      %30 = vector.load %arg5[%c0_11, %c0_12] : memref<16x128xf32, #tpu.memory_space<vmem>>, vector<16x128xf32>
      tpu.vector_store %arg5[%c0_11, %c0_12], %29 {strides = array<i32>} : memref<16x128xf32, #tpu.memory_space<vmem>>, vector<16x128xf32>,
    } else {
    }
    %c16_i32 = arith.constant 16 : i32
    %3 = arith.muli %arg0, %c16_i32 : i32
    %c0 = arith.constant 0 : index
    %c0_1 = arith.constant 0 : index
    %4 = vector.load %arg3[%c0, %c0_1] : memref<1x8xi32, #tpu.memory_space<vmem>>, vector<1x8xi32>
    %5 = vector.broadcast %3 : i32 to vector<1x8xi32>
    %6 = arith.subi %4, %5 : vector<1x8xi32>
    %7 = tpu.iota {dimensions = array<i32: 0>} : vector<16x8xi32>
    %8 = vector.broadcast %6 : vector<1x8xi32> to vector<16x8xi32>
    %9 = arith.cmpi eq, %7, %8 : vector<16x8xi32>
    %c0_2 = arith.constant 0 : index
    %c0_3 = arith.constant 0 : index
    %10 = vector.load %arg4[%c0_2, %c0_3] : memref<8x128xf32, #tpu.memory_space<vmem>>, vector<8x128xf32>
    %11 = arith.extui %9 : vector<16x8xi1> to vector<16x8xi32>
    %12 = arith.sitofp %11 : vector<16x8xi32> to vector<16x8xf32>
    %13 = arith.truncf %12 : vector<16x8xf32> to vector<16x8xbf16>
    %14 = arith.truncf %10 : vector<8x128xf32> to vector<8x128xbf16>
    %15 = arith.extf %14 : vector<8x128xbf16> to vector<8x128xf32>
    %16 = arith.subf %10, %15 : vector<8x128xf32>
    %17 = arith.truncf %16 : vector<8x128xf32> to vector<8x128xbf16>
    %18 = arith.extf %17 : vector<8x128xbf16> to vector<8x128xf32>
    %19 = arith.subf %16, %18 : vector<8x128xf32>
    %20 = arith.truncf %19 : vector<8x128xf32> to vector<8x128xbf16>
    %cst = arith.constant dense<0.000000e+00> : vector<16x128xf32>
    %21 = tpu.matmul %13, %14, %cst {dimension_numbers = #tpu.dot_dimension_numbers<[1], [0], [0], [1], [0, 0, 1, 1], [], []>} : vector<16x8xbf16>, vector<8x128xbf16>, vector<16x128xf32> -> vector<16x128xf32>
    %cst_4 = arith.constant dense<0.000000e+00> : vector<16x128xf32>
    %22 = tpu.matmul %13, %17, %cst_4 {dimension_numbers = #tpu.dot_dimension_numbers<[1], [0], [0], [1], [0, 0, 1, 1], [], []>} : vector<16x8xbf16>, vector<8x128xbf16>, vector<16x128xf32> -> vector<16x128xf32>
    %23 = arith.addf %21, %22 : vector<16x128xf32>
    %cst_5 = arith.constant dense<0.000000e+00> : vector<16x128xf32>
    %24 = tpu.matmul %13, %20, %cst_5 {dimension_numbers = #tpu.dot_dimension_numbers<[1], [0], [0], [1], [0, 0, 1, 1], [], []>} : vector<16x8xbf16>, vector<8x128xbf16>, vector<16x128xf32> -> vector<16x128xf32>
    %25 = arith.addf %23, %24 : vector<16x128xf32>
    %c0_6 = arith.constant 0 : index
    %c0_7 = arith.constant 0 : index
    %26 = vector.load %arg5[%c0_6, %c0_7] : memref<16x128xf32, #tpu.memory_space<vmem>>, vector<16x128xf32>
    %27 = arith.addf %26, %25 : vector<16x128xf32>
    %c0_8 = arith.constant 0 : index
    %c0_9 = arith.constant 0 : index
    %28 = vector.load %arg5[%c0_8, %c0_9] : memref<16x128xf32, #tpu.memory_space<vmem>>, vector<16x128xf32>
    tpu.vector_store %arg5[%c0_8, %c0_9], %27 {strides = array<i32>} : memref<16x128xf32, #tpu.memory_space<vmem>>, vector<16x128xf32>,
    return
  }
  func.func @transform_0(%arg0: i32, %arg1: i32, %arg2: i32) -> (i32, i32) {
    %c0_i32 = arith.constant 0 : i32
    %c0_i32_0 = arith.constant 0 : i32
    return %c0_i32, %arg2 : i32, i32
  }
  func.func @transform_1(%arg0: i32, %arg1: i32, %arg2: i32) -> (i32, i32) {
    %c0_i32 = arith.constant 0 : i32
    return %arg2, %arg1 : i32, i32
  }
  func.func @transform_2(%arg0: i32, %arg1: i32, %arg2: i32) -> (i32, i32) {
    %c0_i32 = arith.constant 0 : i32
    return %arg0, %arg1 : i32, i32
  }
}

</mosaic_0001>

<llo_original>
// kernel: tpu_custom_call.1
$region0: #{tpu_custom_call.1}
  #allocation0 [shape = 'u32[]', space=smem, size = 0x4, offset = 0x4, fixed_abs, tag = 'smem constant byte address 0x4 - core index']
  #allocation1 [shape = 'u32[72,128]{1,0:T(1,128)}', space=vmem, size = 0x9000, scoped, tag = 'internal scratch']
  %s0 = inlined_call_operand.hbm [shape: s32[1,8], index: 0, kind: input, shape index: {}]
  %s1 = inlined_call_operand.hbm [shape: f32[8,32], index: 1, kind: input, shape index: {}]
  %s2 = inlined_call_operand.hbm [shape: f32[16,32], index: 2, kind: output, shape index: {}]
  %s3 = sld [smem:[#allocation0]]
  $region30: #{tpu_custom_call.1} parent=0
    _
  %s5 = ssub.s32 1, %s3
  %s6 = scalar_select 0, %s5, %s3
  $region1: #{tpu_custom_call.1} parent=0
    #allocation2 [shape = 'u8[512]{0}', space=vmem, size = 0x400, scoped, tag = 'input window, operand 0, single buffered']
    #allocation3 [shape = 's32[1]{0}', space=sflag, size = 0x4, scoped, tag = 'scoped memory for tpu_custom_call.1']
    #allocation4 [shape = 's32[1]{0}', space=sflag, size = 0x4, scoped, tag = 'scoped memory for tpu_custom_call.1']
    #allocation5 [shape = 'u8[4096]{0}', space=vmem, size = 0x1000, scoped, tag = 'input window, operand 1, single buffered']
    #allocation6 [shape = 's32[1]{0}', space=sflag, size = 0x4, scoped, tag = 'scoped memory for tpu_custom_call.1']
    #allocation7 [shape = 'u8[8192]{0}', space=vmem, size = 0x2000, scoped, tag = 'output window, operand 0, single buffered']
    %7 = vsyncpa [#allocation3], 0
    %8 = vsyncpa [#allocation6], 0
    %9 = vsyncpa [#allocation4], 0
    // Predicated region
    $region2: #{tpu_custom_call.1} parent=1 // pred_check
      _
    $region3: #{tpu_custom_call.1} parent=1 // pred_check_branch
      %11 = sbr.rel (0) target = $region5
    $region4: #{tpu_custom_call.1} parent=1 // pred_region
      %13 = vsyncadd [#allocation3], 0
      %s15 = sshll.u32 %s0, 4
      %s16 = int_to_ptr.hbm [resolvable:$true] %s15
      %s17 = sshll.u32 [#allocation2], 4
      %s18 = int_to_ptr.vmem [resolvable:$true] %s17
      %20 = dma.hbm_to_vmem [thread:$0]  %s16, 16, %s18, [#allocation3]
    $region5: #{tpu_custom_call.1} parent=1 // pred_fallthru
      _
    // Predicated region
    $region6: #{tpu_custom_call.1} parent=1 // pred_check
      _
    $region7: #{tpu_custom_call.1} parent=1 // pred_check_branch
      %22 = sbr.rel (0) target = $region9
    $region8: #{tpu_custom_call.1} parent=1 // pred_region
      %24 = vsyncadd [#allocation6], 0
      %s26 = sshll.u32 %s1, 4
      %s27 = int_to_ptr.hbm [resolvable:$true] %s26
      %s28 = sshll.u32 [#allocation5], 4
      %s29 = int_to_ptr.vmem [resolvable:$true] %s28
      %31 = dma.hbm_to_vmem [thread:$0]  %s27, 128, %s29, [#allocation6]
    $region9: #{tpu_custom_call.1} parent=1 // pred_fallthru
      _
    // Predicated region
    $region10: #{tpu_custom_call.1} parent=1 // pred_check
      _
    $region11: #{tpu_custom_call.1} parent=1 // pred_check_branch
      %33 = sbr.rel (0) target = $region13
    $region12: #{tpu_custom_call.1} parent=1 // pred_region
      %35 = dma.done [#allocation3], 16
    $region13: #{tpu_custom_call.1} parent=1 // pred_fallthru
      _
    // Predicated region
    $region14: #{tpu_custom_call.1} parent=1 // pred_check
      _
    $region15: #{tpu_custom_call.1} parent=1 // pred_check_branch
      %37 = sbr.rel (0) target = $region17
    $region16: #{tpu_custom_call.1} parent=1 // pred_region
      %39 = dma.done [#allocation6], 128
    $region17: #{tpu_custom_call.1} parent=1 // pred_fallthru
      _
    %p41 = scmp.eq.s32.totalorder 0, 0
    // Predicated region
    $region18: #{tpu_custom_call.1} parent=1 // pred_check
      %p42 = pneg %p41
    $region19: #{tpu_custom_call.1} parent=1 // pred_check_branch
      %44 = sbr.rel (%p42) target = $region21
    $region20: #{tpu_custom_call.1} parent=1 // pred_region
      %45 = vst [vmem:[#allocation7] sm:$0xff] 0.0
      %46 = vst [vmem:[#allocation7 + $0x8] sm:$0xff] 0.0
    $region21: #{tpu_custom_call.1} parent=1 // pred_fallthru
      _
    %s47 = smul.u32 0, 16
    %v48 = vld [vmem:[#allocation2] sm:$0x1]
    %v49 = vstv %s47
    %v50 = vsub.s32 %v48, %v49
    %v51 = vlaneseq
    %v52 = vshrl.u32 %v51, 7
    %v53 = vadd.s32 %v52, 8
    %v54 = vperm.slane %v50, 0
    %vm55 = vcmp.eq.s32.totalorder %v52, %v54
    %vm56 = vcmp.eq.s32.totalorder %v53, %v54
    %v57 = vld [vmem:[#allocation5] sm:$0xff]
    %v58 = vsel %vm55, 1, 0
    %v59 = vsel %vm56, 1, 0
    %v60 = vcvt.s32.f32 %v58
    %v61 = vcvt.s32.f32 %v59
    %v62 = vpack.c.bf16 %v61, %v60
    %v63 = vpack.c.bf16 %v57, %v57
    %v64 = vunpack.c.l.bf16 %v63
    %v65 = vsub.f32 %v57, %v64
    %v66 = vpack.c.bf16 %v65, %v65
    %v67 = vunpack.c.l.bf16 %v66
    %v68 = vsub.f32 %v65, %v67
    %v69 = vpack.c.bf16 %v68, %v68
    %vm70 = vcmask 64512
    %v72 = vsel %vm70, %v62, 0
    %vm74 = vcmask 1043456
    %v76 = vsel %vm74, %v66, 0
    %78 = vmatpush.bf16.msra.mxu0 0
    %79 = vmatpush.bf16.msra.mxu0 0
    %80 = vmatpush.bf16.msra.mxu0 0
    %81 = vmatpush.bf16.msra.mxu0 0
    %82 = vmatpush.bf16.msra.mxu0 0
    %83 = vmatpush.bf16.msra.mxu0 0
    %84 = vmatpush.bf16.msra.mxu0 0
    %85 = vmatpush.bf16.msra.mxu0 %v76
    %86 = vmatmul.bf16.gmra.mxu0 %v72
    %v87 = vpop.f32.mrf.mxu0
    %v88 = vadd.f32 0.0, %v87
    %v89 = vpop.f32.mrf.mxu0
    %v90 = vadd.f32 0.0, %v89
    %91 = vdwg.mxu0
    %v93 = vsel %vm74, %v63, 0
    %95 = vmatpush.bf16.msra.mxu0 0
    %96 = vmatpush.bf16.msra.mxu0 0
    %97 = vmatpush.bf16.msra.mxu0 0
    %98 = vmatpush.bf16.msra.mxu0 0
    %99 = vmatpush.bf16.msra.mxu0 0
    %100 = vmatpush.bf16.msra.mxu0 0
    %101 = vmatpush.bf16.msra.mxu0 0
    %102 = vmatpush.bf16.msra.mxu0 %v93
    %103 = vmatmul.bf16.gmra.mxu0 %v72
    %v104 = vpop.f32.mrf.mxu0
    %v105 = vadd.f32 %v88, %v104
    %v106 = vpop.f32.mrf.mxu0
    %v107 = vadd.f32 %v90, %v106
    %108 = vdwg.mxu0
    %v110 = vsel %vm74, %v69, 0
    %112 = vmatpush.bf16.msra.mxu0 0
    %113 = vmatpush.bf16.msra.mxu0 0
    %114 = vmatpush.bf16.msra.mxu0 0
    %115 = vmatpush.bf16.msra.mxu0 0
    %116 = vmatpush.bf16.msra.mxu0 0
    %117 = vmatpush.bf16.msra.mxu0 0
    %118 = vmatpush.bf16.msra.mxu0 0
    %119 = vmatpush.bf16.msra.mxu0 %v110
    %120 = vmatmul.bf16.gmra.mxu0 %v72
    %v121 = vpop.f32.mrf.mxu0
    %v122 = vadd.f32 0.0, %v121
    %v123 = vpop.f32.mrf.mxu0
    %v124 = vadd.f32 0.0, %v123
    %125 = vdwg.mxu0
    %v126 = vadd.f32 %v105, %v122
    %v127 = vadd.f32 %v107, %v124
    %v128 = vld [vmem:[#allocation7] sm:$0xff]
    %v129 = vld [vmem:[#allocation7 + $0x8] sm:$0xff]
    %v130 = vadd.f32 %v128, %v126
    %v131 = vadd.f32 %v129, %v127
    %132 = vst [vmem:[#allocation7] sm:$0xff] %v130
    %133 = vst [vmem:[#allocation7 + $0x8] sm:$0xff] %v131
    // Predicated region
    $region22: #{tpu_custom_call.1} parent=1 // pred_check
      _
    $region23: #{tpu_custom_call.1} parent=1 // pred_check_branch
      %135 = sbr.rel (0) target = $region25
    $region24: #{tpu_custom_call.1} parent=1 // pred_region
      %137 = vsyncadd [#allocation4], 0
      %s138 = sshll.u32 [#allocation7], 4
      %s139 = int_to_ptr.vmem [resolvable:$true] %s138
      %s140 = sshll.u32 %s2, 4
      %s141 = int_to_ptr.hbm [resolvable:$true] %s140
      %146 = dma.vmem_to_hbm [thread:$0]  %s139, 256, %s141, [#allocation4], 128, 128, 8
    $region25: #{tpu_custom_call.1} parent=1 // pred_fallthru
      _
    // Predicated region
    $region26: #{tpu_custom_call.1} parent=1 // pred_check
      _
    $region27: #{tpu_custom_call.1} parent=1 // pred_check_branch
      %148 = sbr.rel (0) target = $region29
    $region28: #{tpu_custom_call.1} parent=1 // pred_region
      %150 = dma.done [#allocation4], 256
    $region29: #{tpu_custom_call.1} parent=1 // pred_fallthru
      _
    %151 = vsyncpa [#allocation3], 1
    %152 = vsyncpa [#allocation6], 1
    %153 = vsyncpa [#allocation4], 1

</llo_original>
